<compile_context>
chip_gen: v7x
topology: tpu7x:2x2x1
jax: 0.10.0
libtpu: 0.0.40
codegen_flags: <defaults>
</compile_context>

<pallas_src>
import jax
import jax.numpy as jnp
from jax.experimental import pallas as pl
from jax.experimental.pallas import tpu as pltpu

INPUT_DIM = 14
H1, H2, H3 = 64, 128, 64
OUTPUT_DIM = 1
BN_EPS = 1e-5
TM_MAX = 1024  # batch tile: multiple of 256 (v6e/v7x MXU width) and 128 (lane width)


def _round_up(v, m):
    return ((v + m - 1) // m) * m


# ----------------------------- kernel -----------------------------------------------


def _cvd_kernel(x_ref,
                w1t_ref, c1_ref,
                w2t_ref, c2_ref,
                w3t_ref, c3_ref,
                w4t_ref, c4_ref,
                out_ref):
    # Cast x in-kernel (no wrapper-side HBM round trip); tile is (TM, 14).
    xt = x_ref[...].astype(w1t_ref.dtype)

    # layer1 (+ folded bn1) + relu1, batch-on-lanes:
    #   h1T (64, TM) = w1t (64, 14) . x (TM, 14)  contracting the feature dim of both
    #   (the only place the small (TM, 14) tile gets relaid out).
    h = jax.lax.dot_general(
        w1t_ref[...], xt,
        dimension_numbers=(((1,), (1,)), ((), ())),
        preferred_element_type=jnp.float32)
    h = jnp.maximum(h + c1_ref[...], 0.0)                 # f32 epilogue, bias (64, 1)

    # layer2 (+ folded bn2) + relu2: h2T (128, TM) = w2t (128, 64) @ h1T (64, TM)
    h = jnp.dot(w2t_ref[...], h.astype(w2t_ref.dtype),
                preferred_element_type=jnp.float32)
    h = jnp.maximum(h + c2_ref[...], 0.0)

    # dropout1(p=0.5): identity in eval mode

    # layer3 (+ folded bn3) + relu3: h3T (64, TM) = w3t (64, 128) @ h2T (128, TM)
    h = jnp.dot(w3t_ref[...], h.astype(w3t_ref.dtype),
                preferred_element_type=jnp.float32)
    h = jnp.maximum(h + c3_ref[...], 0.0)

    # layer4 + sigmoid: logits (1, TM) = w4t (1, 64) @ h3T (64, TM)  -> lane-dense store
    logits = jnp.dot(w4t_ref[...], h.astype(w4t_ref.dtype),
                     preferred_element_type=jnp.float32)
    out_ref[...] = jax.nn.sigmoid(logits + c4_ref[...]).astype(out_ref.dtype)


# ----------------------------- wrapper -----------------------------------------------


@jax.jit
def cvd_forward(x, params):
    """x: (batch, 14) f32. params: folded transposed params (see fold_params).

    Returns (batch, 1) f32 probabilities.
    """
    (w1t, c1, w2t, c2, w3t, c3, w4t, c4) = params
    b = x.shape[0]

    # Balanced tiling: >= 2 roughly equal tiles when possible (v7x 2-TC load balance),
    # capped at TM_MAX; lane-dense (1, tm) output blocks (tm % 128 == 0).
    tm = min(TM_MAX, _round_up(-(-b // 2), 128))
    grid = (pl.cdiv(b, tm),)                       # ragged last block handled by Pallas

    in_specs = [pl.BlockSpec((tm, INPUT_DIM), lambda i: (i, 0))]
    # Parameters: one full-array block each, replicated across the batch grid.
    in_specs += [pl.BlockSpec(p.shape, lambda i: (0, 0)) for p in params]
    out_spec = pl.BlockSpec((1, tm), lambda i: (0, i))

    out_t = pl.pallas_call(
        _cvd_kernel,
        out_shape=jax.ShapeDtypeStruct((1, b), jnp.float32),
        grid_spec=pltpu.PrefetchScalarGridSpec(
            num_scalar_prefetch=0,
            grid=grid,
            in_specs=in_specs,
            out_specs=out_spec,
        ),
        compiler_params=pltpu.CompilerParams(
            dimension_semantics=("parallel",),     # shards batch tiles across v7x's 2 TCs
        ),
    )(x, w1t, c1, w2t, c2, w3t, c3, w4t, c4)

    return out_t.reshape(b, OUTPUT_DIM)


# ----------------------------- parameters --------------------------------------------


def init_raw_params(key):
    """PyTorch-like init: Linear uniform fan-in; BN gamma/beta/running stats."""
    def linear(k, fan_in, fan_out):
        kw, kb = jax.random.split(k)
        bound = 1.0 / float(fan_in) ** 0.5
        w = jax.random.uniform(kw, (fan_in, fan_out), jnp.float32, -bound, bound)
        b = jax.random.uniform(kb, (1, fan_out), jnp.float32, -bound, bound)
        return w, b

    def bn(k, dim):
        kg, kb, km, kv = jax.random.split(k, 4)
        gamma = 1.0 + 0.1 * jax.random.normal(kg, (1, dim), jnp.float32)
        beta = 0.1 * jax.random.normal(kb, (1, dim), jnp.float32)
        mean = 0.1 * jax.random.normal(km, (1, dim), jnp.float32)
        var = 1.0 + 0.1 * jax.random.uniform(kv, (1, dim), jnp.float32)
        return gamma, beta, mean, var

    ks = jax.random.split(key, 7)
    w1, b1 = linear(ks[0], INPUT_DIM, H1)
    g1, be1, m1, v1 = bn(ks[1], H1)
    w2, b2 = linear(ks[2], H1, H2)
    g2, be2, m2, v2 = bn(ks[3], H2)
    w3, b3 = linear(ks[4], H2, H3)
    g3, be3, m3, v3 = bn(ks[5], H3)
    w4, b4 = linear(ks[6], H3, OUTPUT_DIM)
    return (w1, b1, g1, be1, m1, v1,
            w2, b2, g2, be2, m2, v2,
            w3, b3, g3, be3, m3, v3,
            w4, b4)


def fold_params(raw, dtype=jnp.bfloat16):
    """Fold eval-mode BN into each Linear and store weights TRANSPOSED (batch-on-lanes).

    W' = W*scale (per output column), c = b*scale + (beta - mean*scale).
    Weights are stored as (out, in) in `dtype` (bf16 default, MXU-native);
    biases stay f32 column vectors (out, 1) for the f32 epilogue.
    """
    (w1, b1, g1, be1, m1, v1,
     w2, b2, g2, be2, m2, v2,
     w3, b3, g3, be3, m3, v3,
     w4, b4) = raw

    def fold(w, b, g, be, m, v):
        scale = g / jnp.sqrt(v + BN_EPS)                        # (1, out)
        wt = (w * scale).T.astype(dtype)                        # (out, in)
        c = (b * scale + (be - m * scale)).T.astype(jnp.float32)  # (out, 1)
        return wt, c

    w1t, c1 = fold(w1, b1, g1, be1, m1, v1)
    w2t, c2 = fold(w2, b2, g2, be2, m2, v2)
    w3t, c3 = fold(w3, b3, g3, be3, m3, v3)
    w4t = w4.T.astype(dtype)                                    # (1, H3)
    c4 = b4.T.astype(jnp.float32)                               # (1, 1)
    return (w1t, c1, w2t, c2, w3t, c3, w4t, c4)


def _reference(x, raw):
    """Pure-JAX eval-mode reference with explicit (unfolded) BatchNorm."""
    (w1, b1, g1, be1, m1, v1,
     w2, b2, g2, be2, m2, v2,
     w3, b3, g3, be3, m3, v3,
     w4, b4) = raw

    def bn(h, g, be, m, v):
        return (h - m) / jnp.sqrt(v + BN_EPS) * g + be

    h = jnp.maximum(bn(x @ w1 + b1, g1, be1, m1, v1), 0.0)
    h = jnp.maximum(bn(h @ w2 + b2, g2, be2, m2, v2), 0.0)
    h = jnp.maximum(bn(h @ w3 + b3, g3, be3, m3, v3), 0.0)
    return jax.nn.sigmoid(h @ w4 + b4)


# ----------------------------- demo / checks ------------------------------------------


if __name__ == "__main__":
    key = jax.random.PRNGKey(0)
    k_params, k_x1, k_x2 = jax.random.split(key, 3)
    raw = init_raw_params(k_params)

    # 1) small batch (2), f32 params: tight correctness check, single (128-wide) tile.
    params_f32 = fold_params(raw, jnp.float32)
    x_small = jax.random.normal(k_x1, (2, INPUT_DIM), jnp.float32)
    out_small = jax.block_until_ready(cvd_forward(x_small, params_f32))
    ref_small = _reference(x_small, raw)
    assert out_small.shape == (2, OUTPUT_DIM), out_small.shape
    assert jnp.allclose(out_small, ref_small, atol=1e-4, rtol=1e-4)

    # 2) default bf16 weights, ragged multi-tile batch (300 -> two tiles of 256 / 44):
    #    exercises the masked last block and the balanced 2-tile grid.
    params_bf16 = fold_params(raw)                     # bf16 is the default now
    x_big = jax.random.normal(k_x2, (300, INPUT_DIM), jnp.float32)
    out_big = jax.block_until_ready(cvd_forward(x_big, params_bf16))
    ref_big = _reference(x_big, raw)
    assert out_big.shape == (300, OUTPUT_DIM), out_big.shape
    assert float(jnp.max(jnp.abs(out_big - ref_big))) < 5e-2

    print("KERNEL_OK")
</pallas_src>

<mosaic_0001>
module attributes {stable_mosaic.version = 11 : i64} {
  func.func @_cvd_kernel(%arg0: i32, %arg1: memref<128x14xf32, #tpu.memory_space<vmem>>, %arg2: memref<64x14xf32, #tpu.memory_space<vmem>>, %arg3: memref<64x1xf32, #tpu.memory_space<vmem>>, %arg4: memref<128x64xf32, #tpu.memory_space<vmem>>, %arg5: memref<128x1xf32, #tpu.memory_space<vmem>>, %arg6: memref<64x128xf32, #tpu.memory_space<vmem>>, %arg7: memref<64x1xf32, #tpu.memory_space<vmem>>, %arg8: memref<1x64xf32, #tpu.memory_space<vmem>>, %arg9: memref<1x1xf32, #tpu.memory_space<vmem>>, %arg10: memref<1x128xf32, #tpu.memory_space<vmem>>) attributes {dimension_semantics = [#tpu.dimension_semantics<parallel>], iteration_bounds = array<i64: 1>, scalar_prefetch = 0 : i64, scratch_operands = 0 : i64, tpu.core_type = #tpu.core_type<tc>, window_params = [{transform_indices = @transform_0, window_bounds = array<i64: 128, 14>}, {pipeline_mode = #tpu.pipeline_mode<synchronous>, transform_indices = @transform_1, window_bounds = array<i64: 64, 14>}, {pipeline_mode = #tpu.pipeline_mode<synchronous>, transform_indices = @transform_2, window_bounds = array<i64: 64, 1>}, {pipeline_mode = #tpu.pipeline_mode<synchronous>, transform_indices = @transform_3, window_bounds = array<i64: 128, 64>}, {pipeline_mode = #tpu.pipeline_mode<synchronous>, transform_indices = @transform_4, window_bounds = array<i64: 128, 1>}, {pipeline_mode = #tpu.pipeline_mode<synchronous>, transform_indices = @transform_5, window_bounds = array<i64: 64, 128>}, {pipeline_mode = #tpu.pipeline_mode<synchronous>, transform_indices = @transform_6, window_bounds = array<i64: 64, 1>}, {pipeline_mode = #tpu.pipeline_mode<synchronous>, transform_indices = @transform_7, window_bounds = array<i64: 1, 64>}, {pipeline_mode = #tpu.pipeline_mode<synchronous>, transform_indices = @transform_8, window_bounds = array<i64: 1, 1>}, {transform_indices = @transform_9, window_bounds = array<i64: 1, 128>}]} {
    %c0 = arith.constant 0 : index
    %c0_0 = arith.constant 0 : index
    %0 = vector.load %arg1[%c0, %c0_0] : memref<128x14xf32, #tpu.memory_space<vmem>>, vector<128x14xf32>
    %c0_1 = arith.constant 0 : index
    %c0_2 = arith.constant 0 : index
    %1 = vector.load %arg2[%c0_1, %c0_2] : memref<64x14xf32, #tpu.memory_space<vmem>>, vector<64x14xf32>
    %cst = arith.constant dense<0.000000e+00> : vector<64x128xf32>
    %2 = tpu.matmul %1, %0, %cst {dimension_numbers = #tpu.dot_dimension_numbers<[1], [1], [0], [0], [0, 0, 1, 0], [], []>} : vector<64x14xf32>, vector<128x14xf32>, vector<64x128xf32> -> vector<64x128xf32>
    %c0_3 = arith.constant 0 : index
    %c0_4 = arith.constant 0 : index
    %3 = vector.load %arg3[%c0_3, %c0_4] : memref<64x1xf32, #tpu.memory_space<vmem>>, vector<64x1xf32>
    %4 = vector.broadcast %3 : vector<64x1xf32> to vector<64x128xf32>
    %5 = arith.addf %2, %4 : vector<64x128xf32>
    %cst_5 = arith.constant 0.000000e+00 : f32
    %6 = vector.broadcast %cst_5 : f32 to vector<64x128xf32>
    %7 = arith.maximumf %5, %6 : vector<64x128xf32>
    %c0_6 = arith.constant 0 : index
    %c0_7 = arith.constant 0 : index
    %8 = vector.load %arg4[%c0_6, %c0_7] : memref<128x64xf32, #tpu.memory_space<vmem>>, vector<128x64xf32>
    %cst_8 = arith.constant dense<0.000000e+00> : vector<128x128xf32>
    %9 = tpu.matmul %8, %7, %cst_8 {dimension_numbers = #tpu.dot_dimension_numbers<[1], [0], [0], [1], [0, 0, 1, 1], [], []>} : vector<128x64xf32>, vector<64x128xf32>, vector<128x128xf32> -> vector<128x128xf32>
    %c0_9 = arith.constant 0 : index
    %c0_10 = arith.constant 0 : index
    %10 = vector.load %arg5[%c0_9, %c0_10] : memref<128x1xf32, #tpu.memory_space<vmem>>, vector<128x1xf32>
    %11 = vector.broadcast %10 : vector<128x1xf32> to vector<128x128xf32>
    %12 = arith.addf %9, %11 : vector<128x128xf32>
    %cst_11 = arith.constant 0.000000e+00 : f32
    %13 = vector.broadcast %cst_11 : f32 to vector<128x128xf32>
    %14 = arith.maximumf %12, %13 : vector<128x128xf32>
    %c0_12 = arith.constant 0 : index
    %c0_13 = arith.constant 0 : index
    %15 = vector.load %arg6[%c0_12, %c0_13] : memref<64x128xf32, #tpu.memory_space<vmem>>, vector<64x128xf32>
    %cst_14 = arith.constant dense<0.000000e+00> : vector<64x128xf32>
    %16 = tpu.matmul %15, %14, %cst_14 {dimension_numbers = #tpu.dot_dimension_numbers<[1], [0], [0], [1], [0, 0, 1, 1], [], []>} : vector<64x128xf32>, vector<128x128xf32>, vector<64x128xf32> -> vector<64x128xf32>
    %c0_15 = arith.constant 0 : index
    %c0_16 = arith.constant 0 : index
    %17 = vector.load %arg7[%c0_15, %c0_16] : memref<64x1xf32, #tpu.memory_space<vmem>>, vector<64x1xf32>
    %18 = vector.broadcast %17 : vector<64x1xf32> to vector<64x128xf32>
    %19 = arith.addf %16, %18 : vector<64x128xf32>
    %cst_17 = arith.constant 0.000000e+00 : f32
    %20 = vector.broadcast %cst_17 : f32 to vector<64x128xf32>
    %21 = arith.maximumf %19, %20 : vector<64x128xf32>
    %c0_18 = arith.constant 0 : index
    %c0_19 = arith.constant 0 : index
    %22 = vector.load %arg8[%c0_18, %c0_19] : memref<1x64xf32, #tpu.memory_space<vmem>>, vector<1x64xf32>
    %cst_20 = arith.constant dense<0.000000e+00> : vector<1x128xf32>
    %23 = tpu.matmul %22, %21, %cst_20 {dimension_numbers = #tpu.dot_dimension_numbers<[1], [0], [0], [1], [0, 0, 1, 1], [], []>} : vector<1x64xf32>, vector<64x128xf32>, vector<1x128xf32> -> vector<1x128xf32>
    %c0_21 = arith.constant 0 : index
    %c0_22 = arith.constant 0 : index
    %24 = vector.load %arg9[%c0_21, %c0_22] : memref<1x1xf32, #tpu.memory_space<vmem>>, vector<1x1xf32>
    %25 = vector.broadcast %24 : vector<1x1xf32> to vector<1x128xf32>
    %26 = arith.addf %23, %25 : vector<1x128xf32>
    %27 = arith.negf %26 : vector<1x128xf32>
    %28 = math.exp %27 : vector<1x128xf32>
    %cst_23 = arith.constant 1.000000e+00 : f32
    %29 = vector.broadcast %cst_23 : f32 to vector<1x128xf32>
    %30 = arith.addf %29, %28 : vector<1x128xf32>
    %31 = arith.divf %29, %30 : vector<1x128xf32>
    %c0_24 = arith.constant 0 : index
    %c0_25 = arith.constant 0 : index
    %32 = vector.load %arg10[%c0_24, %c0_25] : memref<1x128xf32, #tpu.memory_space<vmem>>, vector<1x128xf32>
    tpu.vector_store %arg10[%c0_24, %c0_25], %31 {strides = array<i32>} : memref<1x128xf32, #tpu.memory_space<vmem>>, vector<1x128xf32>,
    return
  }
  func.func @transform_0(%arg0: i32) -> (i32, i32) {
    %c0_i32 = arith.constant 0 : i32
    %c0_i32_0 = arith.constant 0 : i32
    return %arg0, %c0_i32 : i32, i32
  }
  func.func @transform_1(%arg0: i32) -> (i32, i32) {
    %c0_i32 = arith.constant 0 : i32
    %c0_i32_0 = arith.constant 0 : i32
    %c0_i32_1 = arith.constant 0 : i32
    return %c0_i32, %c0_i32_0 : i32, i32
  }
  func.func @transform_2(%arg0: i32) -> (i32, i32) {
    %c0_i32 = arith.constant 0 : i32
    %c0_i32_0 = arith.constant 0 : i32
    %c0_i32_1 = arith.constant 0 : i32
    return %c0_i32, %c0_i32_0 : i32, i32
  }
  func.func @transform_3(%arg0: i32) -> (i32, i32) {
    %c0_i32 = arith.constant 0 : i32
    %c0_i32_0 = arith.constant 0 : i32
    %c0_i32_1 = arith.constant 0 : i32
    return %c0_i32, %c0_i32_0 : i32, i32
  }
  func.func @transform_4(%arg0: i32) -> (i32, i32) {
    %c0_i32 = arith.constant 0 : i32
    %c0_i32_0 = arith.constant 0 : i32
    %c0_i32_1 = arith.constant 0 : i32
    return %c0_i32, %c0_i32_0 : i32, i32
  }
  func.func @transform_5(%arg0: i32) -> (i32, i32) {
    %c0_i32 = arith.constant 0 : i32
    %c0_i32_0 = arith.constant 0 : i32
    %c0_i32_1 = arith.constant 0 : i32
    return %c0_i32, %c0_i32_0 : i32, i32
  }
  func.func @transform_6(%arg0: i32) -> (i32, i32) {
    %c0_i32 = arith.constant 0 : i32
    %c0_i32_0 = arith.constant 0 : i32
    %c0_i32_1 = arith.constant 0 : i32
    return %c0_i32, %c0_i32_0 : i32, i32
  }
  func.func @transform_7(%arg0: i32) -> (i32, i32) {
    %c0_i32 = arith.constant 0 : i32
    %c0_i32_0 = arith.constant 0 : i32
    %c0_i32_1 = arith.constant 0 : i32
    return %c0_i32, %c0_i32_0 : i32, i32
  }
  func.func @transform_8(%arg0: i32) -> (i32, i32) {
    %c0_i32 = arith.constant 0 : i32
    %c0_i32_0 = arith.constant 0 : i32
    %c0_i32_1 = arith.constant 0 : i32
    return %c0_i32, %c0_i32_0 : i32, i32
  }
  func.func @transform_9(%arg0: i32) -> (i32, i32) {
    %c0_i32 = arith.constant 0 : i32
    %c0_i32_0 = arith.constant 0 : i32
    return %c0_i32, %arg0 : i32, i32
  }
}

</mosaic_0001>

<llo_original>
// kernel: cvd_forward.1
$region0: #{cvd_forward.1}
  #allocation0 [shape = 'u32[]', space=smem, size = 0x4, offset = 0x4, fixed_abs, tag = 'smem constant byte address 0x4 - core index']
  #allocation1 [shape = 'u32[144,128]{1,0:T(1,128)}', space=vmem, size = 0x12000, scoped, tag = 'internal scratch']
  #allocation2 [shape = 'f32[1,1]{1,0:T(1,128)S(1)}', space=vmem, size = 0x200, scoped, tag = 'scoped memory for cvd_forward.1']
  %s0 = inlined_call_operand.vmem [shape: f32[2,14], index: 0, kind: input, shape index: {}]
  %s1 = inlined_call_operand.vmem [shape: f32[64,14], index: 1, kind: input, shape index: {}]
  %s2 = inlined_call_operand.vmem [shape: f32[64,1], index: 2, kind: input, shape index: {}]
  %s3 = inlined_call_operand.vmem [shape: f32[128,64], index: 3, kind: input, shape index: {}]
  %s4 = inlined_call_operand.vmem [shape: f32[128,1], index: 4, kind: input, shape index: {}]
  %s5 = inlined_call_operand.vmem [shape: f32[64,128], index: 5, kind: input, shape index: {}]
  %s6 = inlined_call_operand.vmem [shape: f32[64,1], index: 6, kind: input, shape index: {}]
  %s7 = inlined_call_operand.vmem [shape: f32[1,64], index: 7, kind: input, shape index: {}]
  %s8 = inlined_call_operand.<no memory space> [shape: f32[1,1], index: 8, kind: input, shape index: {}]
  %s9 = inlined_call_operand.hbm [shape: f32[1,2], index: 9, kind: output, shape index: {}]
  %s10 = sld [smem:[#allocation0]]
  $region46: #{cvd_forward.1} parent=0
    _
  %s12 = ssub.s32 1, %s10
  %s13 = scalar_select 0, %s12, %s10
  %v14 = vstv %s8
  %15 = vst [vmem:[#allocation2] sm:$0x1] %v14
  $region1: #{cvd_forward.1} parent=0
    #allocation3 [shape = 'u8[512]{0}', space=vmem, size = 0x400, scoped, tag = 'output window, operand 0, single buffered']
    #allocation4 [shape = 's32[1]{0}', space=sflag, size = 0x4, scoped, tag = 'scoped memory for cvd_forward.1']
    %16 = vsyncpa [#allocation4], 0
    // Predicated region
    $region2: #{cvd_forward.1} parent=1 // pred_check
      _
    $region3: #{cvd_forward.1} parent=1 // pred_check_branch
      %18 = sbr.rel (0) target = $region5
    $region4: #{cvd_forward.1} parent=1 // pred_region
      _
    $region5: #{cvd_forward.1} parent=1 // pred_fallthru
      _
    // Predicated region
    $region6: #{cvd_forward.1} parent=1 // pred_check
      _
    $region7: #{cvd_forward.1} parent=1 // pred_check_branch
      %20 = sbr.rel (0) target = $region9
    $region8: #{cvd_forward.1} parent=1 // pred_region
      _
    $region9: #{cvd_forward.1} parent=1 // pred_fallthru
      _
    // Predicated region
    $region10: #{cvd_forward.1} parent=1 // pred_check
      _
    $region11: #{cvd_forward.1} parent=1 // pred_check_branch
      %22 = sbr.rel (0) target = $region13
    $region12: #{cvd_forward.1} parent=1 // pred_region
      _
    $region13: #{cvd_forward.1} parent=1 // pred_fallthru
      _
    // Predicated region
    $region14: #{cvd_forward.1} parent=1 // pred_check
      _
    $region15: #{cvd_forward.1} parent=1 // pred_check_branch
      %24 = sbr.rel (0) target = $region17
    $region16: #{cvd_forward.1} parent=1 // pred_region
      _
    $region17: #{cvd_forward.1} parent=1 // pred_fallthru
      _
    // Predicated region
    $region18: #{cvd_forward.1} parent=1 // pred_check
      _
    $region19: #{cvd_forward.1} parent=1 // pred_check_branch
      %26 = sbr.rel (0) target = $region21
    $region20: #{cvd_forward.1} parent=1 // pred_region
      _
    $region21: #{cvd_forward.1} parent=1 // pred_fallthru
      _
    // Predicated region
    $region22: #{cvd_forward.1} parent=1 // pred_check
      _
    $region23: #{cvd_forward.1} parent=1 // pred_check_branch
      %28 = sbr.rel (0) target = $region25
    $region24: #{cvd_forward.1} parent=1 // pred_region
      _
    $region25: #{cvd_forward.1} parent=1 // pred_fallthru
      _
    // Predicated region
    $region26: #{cvd_forward.1} parent=1 // pred_check
      _
    $region27: #{cvd_forward.1} parent=1 // pred_check_branch
      %30 = sbr.rel (0) target = $region29
    $region28: #{cvd_forward.1} parent=1 // pred_region
      _
    $region29: #{cvd_forward.1} parent=1 // pred_fallthru
      _
    // Predicated region
    $region30: #{cvd_forward.1} parent=1 // pred_check
      _
    $region31: #{cvd_forward.1} parent=1 // pred_check_branch
      %32 = sbr.rel (0) target = $region33
    $region32: #{cvd_forward.1} parent=1 // pred_region
      _
    $region33: #{cvd_forward.1} parent=1 // pred_fallthru
      _
    // Predicated region
    $region34: #{cvd_forward.1} parent=1 // pred_check
      _
    $region35: #{cvd_forward.1} parent=1 // pred_check_branch
      %34 = sbr.rel (0) target = $region37
    $region36: #{cvd_forward.1} parent=1 // pred_region
      _
    $region37: #{cvd_forward.1} parent=1 // pred_fallthru
      _
    %v35 = vld [vmem:[%s0] sm:$0xff]
    %v36 = vld [vmem:[%s0 + $0x8] sm:$0xff]
    %v37 = vld [vmem:[%s0 + $0x10] sm:$0xff]
    %v38 = vld [vmem:[%s0 + $0x18] sm:$0xff]
    %v39 = vld [vmem:[%s0 + $0x20] sm:$0xff]
    %v40 = vld [vmem:[%s0 + $0x28] sm:$0xff]
    %v41 = vld [vmem:[%s0 + $0x30] sm:$0xff]
    %v42 = vld [vmem:[%s0 + $0x38] sm:$0xff]
    %v43 = vld [vmem:[%s0 + $0x40] sm:$0xff]
    %v44 = vld [vmem:[%s0 + $0x48] sm:$0xff]
    %v45 = vld [vmem:[%s0 + $0x50] sm:$0xff]
    %v46 = vld [vmem:[%s0 + $0x58] sm:$0xff]
    %v47 = vld [vmem:[%s0 + $0x60] sm:$0xff]
    %v48 = vld [vmem:[%s0 + $0x68] sm:$0xff]
    %v49 = vld [vmem:[%s0 + $0x70] sm:$0xff]
    %v50 = vld [vmem:[%s0 + $0x78] sm:$0xff]
    %v51 = vld [vmem:[%s1] sm:$0xff]
    %v52 = vld [vmem:[%s1 + $0x8] sm:$0xff]
    %v53 = vld [vmem:[%s1 + $0x10] sm:$0xff]
    %v54 = vld [vmem:[%s1 + $0x18] sm:$0xff]
    %v55 = vld [vmem:[%s1 + $0x20] sm:$0xff]
    %v56 = vld [vmem:[%s1 + $0x28] sm:$0xff]
    %v57 = vld [vmem:[%s1 + $0x30] sm:$0xff]
    %v58 = vld [vmem:[%s1 + $0x38] sm:$0xff]
    %v59 = vld [vmem:[%s2] sm:$0xff]
    %v60 = vld [vmem:[%s2 + $0x8] sm:$0xff]
    %v61 = vld [vmem:[%s2 + $0x10] sm:$0xff]
    %v62 = vld [vmem:[%s2 + $0x18] sm:$0xff]
    %v63 = vld [vmem:[%s2 + $0x20] sm:$0xff]
    %v64 = vld [vmem:[%s2 + $0x28] sm:$0xff]
    %v65 = vld [vmem:[%s2 + $0x30] sm:$0xff]
    %v66 = vld [vmem:[%s2 + $0x38] sm:$0xff]
    %68 = vset.pattern.permute.xlu0 0
    %69 = vperm.xlu0 %68, %v59
    %v70 = vpop.permute.xlu0 %69
    %73 = vset.pattern.permute.xlu0 0
    %74 = vperm.xlu0 %73, %v60
    %v75 = vpop.permute.xlu0 %74
    %78 = vset.pattern.permute.xlu0 0
    %79 = vperm.xlu0 %78, %v61
    %v80 = vpop.permute.xlu0 %79
    %83 = vset.pattern.permute.xlu0 0
    %84 = vperm.xlu0 %83, %v62
    %v85 = vpop.permute.xlu0 %84
    %88 = vset.pattern.permute.xlu0 0
    %89 = vperm.xlu0 %88, %v63
    %v90 = vpop.permute.xlu0 %89
    %93 = vset.pattern.permute.xlu0 0
    %94 = vperm.xlu0 %93, %v64
    %v95 = vpop.permute.xlu0 %94
    %98 = vset.pattern.permute.xlu0 0
    %99 = vperm.xlu0 %98, %v65
    %v100 = vpop.permute.xlu0 %99
    %103 = vset.pattern.permute.xlu0 0
    %104 = vperm.xlu0 %103, %v66
    %v105 = vpop.permute.xlu0 %104
    %vm107 = vcmask 113664
    %v109 = vsel %vm107, %v51, 0
    %v112 = vsel %vm107, %v52, 0
    %v115 = vsel %vm107, %v53, 0
    %v118 = vsel %vm107, %v54, 0
    %v121 = vsel %vm107, %v55, 0
    %v124 = vsel %vm107, %v56, 0
    %v127 = vsel %vm107, %v57, 0
    %v130 = vsel %vm107, %v58, 0
    %v133 = vsel %vm107, %v35, 0
    %v136 = vsel %vm107, %v36, 0
    %v139 = vsel %vm107, %v37, 0
    %v142 = vsel %vm107, %v38, 0
    %v145 = vsel %vm107, %v39, 0
    %v148 = vsel %vm107, %v40, 0
    %v151 = vsel %vm107, %v41, 0
    %v154 = vsel %vm107, %v42, 0
    %v157 = vsel %vm107, %v43, 0
    %v160 = vsel %vm107, %v44, 0
    %v163 = vsel %vm107, %v45, 0
    %v166 = vsel %vm107, %v46, 0
    %v169 = vsel %vm107, %v47, 0
    %v172 = vsel %vm107, %v48, 0
    %v175 = vsel %vm107, %v49, 0
    %v178 = vsel %vm107, %v50, 0
    %180 = vmatprep.subr.mxu0 0.0
    %181 = vmatpush1.xpose.msra.mxu0 %v133
    %182 = vmatprep.subr.mxu0 0.0
    %183 = vmatpush1.xpose.msra.mxu0 %v136
    %184 = vmatprep.subr.mxu0 0.0
    %185 = vmatpush1.xpose.msra.mxu0 %v139
    %186 = vmatprep.subr.mxu0 0.0
    %187 = vmatpush1.xpose.msra.mxu0 %v142
    %188 = vmatprep.subr.mxu0 0.0
    %189 = vmatpush1.xpose.msra.mxu0 %v145
    %190 = vmatprep.subr.mxu0 0.0
    %191 = vmatpush1.xpose.msra.mxu0 %v148
    %192 = vmatprep.subr.mxu0 0.0
    %193 = vmatpush1.xpose.msra.mxu0 %v151
    %194 = vmatprep.subr.mxu0 0.0
    %195 = vmatpush1.xpose.msra.mxu0 %v154
    %196 = vmatprep.subr.mxu0 0.0
    %197 = vmatpush1.xpose.msra.mxu0 %v157
    %198 = vmatprep.subr.mxu0 0.0
    %199 = vmatpush1.xpose.msra.mxu0 %v160
    %200 = vmatprep.subr.mxu0 0.0
    %201 = vmatpush1.xpose.msra.mxu0 %v163
    %202 = vmatprep.subr.mxu0 0.0
    %203 = vmatpush1.xpose.msra.mxu0 %v166
    %204 = vmatprep.subr.mxu0 0.0
    %205 = vmatpush1.xpose.msra.mxu0 %v169
    %206 = vmatprep.subr.mxu0 0.0
    %207 = vmatpush1.xpose.msra.mxu0 %v172
    %208 = vmatprep.subr.mxu0 0.0
    %209 = vmatpush1.xpose.msra.mxu0 %v175
    %210 = vmatprep.subr.mxu0 0.0
    %211 = vmatpush1.xpose.msra.mxu0 %v178
    %212 = vmatprep.subr.mxu0 0.0
    %213 = vmatpush1.xpose.msra.mxu0 0.0
    %214 = vmatprep.subr.mxu0 0.0
    %215 = vmatpush1.xpose.msra.mxu0 0.0
    %216 = vmatprep.subr.mxu0 0.0
    %217 = vmatpush1.xpose.msra.mxu0 0.0
    %218 = vmatprep.subr.mxu0 0.0
    %219 = vmatpush1.xpose.msra.mxu0 0.0
    %220 = vmatprep.subr.mxu0 0.0
    %221 = vmatpush1.xpose.msra.mxu0 0.0
    %222 = vmatprep.subr.mxu0 0.0
    %223 = vmatpush1.xpose.msra.mxu0 0.0
    %224 = vmatprep.subr.mxu0 0.0
    %225 = vmatpush1.xpose.msra.mxu0 0.0
    %226 = vmatprep.subr.mxu0 0.0
    %227 = vmatpush1.xpose.msra.mxu0 0.0
    %228 = vmatprep.subr.mxu0 0.0
    %229 = vmatpush1.xpose.msra.mxu0 0.0
    %230 = vmatprep.subr.mxu0 0.0
    %231 = vmatpush1.xpose.msra.mxu0 0.0
    %232 = vmatprep.subr.mxu0 0.0
    %233 = vmatpush1.xpose.msra.mxu0 0.0
    %234 = vmatprep.subr.mxu0 0.0
    %235 = vmatpush1.xpose.msra.mxu0 0.0
    %236 = vmatprep.subr.mxu0 0.0
    %237 = vmatpush1.xpose.msra.mxu0 0.0
    %238 = vmatprep.subr.mxu0 0.0
    %239 = vmatpush1.xpose.msra.mxu0 0.0
    %240 = vmatprep.subr.mxu0 0.0
    %241 = vmatpush1.xpose.msra.mxu0 0.0
    %242 = vmatprep.subr.mxu0 0.0
    %243 = vmatpush1.xpose.msra.mxu0 0.0
    %244 = vmatprep.mubr.f32.mxu0 0.0
    %245 = vmatmul.mubr.f32.gmra.mrb[0].mxu0 %v109
    %v246 = vpop.f32.mrb[0].mxu0
    %v247 = vadd.f32 %v70, %v246
    %v248 = vpop.f32.mrb[0].mxu0
    %249 = vmatprep.mubr.f32.mxu0 0.0
    %250 = vmatmul.mubr.f32.gmra.mrb[0].mxu0 %v112
    %v251 = vpop.f32.mrb[0].mxu0
    %v252 = vadd.f32 %v75, %v251
    %v253 = vpop.f32.mrb[0].mxu0
    %254 = vmatprep.mubr.f32.mxu0 0.0
    %255 = vmatmul.mubr.f32.gmra.mrb[0].mxu0 %v115
    %v256 = vpop.f32.mrb[0].mxu0
    %v257 = vadd.f32 %v80, %v256
    %v258 = vpop.f32.mrb[0].mxu0
    %259 = vmatprep.mubr.f32.mxu0 0.0
    %260 = vmatmul.mubr.f32.gmra.mrb[0].mxu0 %v118
    %v261 = vpop.f32.mrb[0].mxu0
    %v262 = vadd.f32 %v85, %v261
    %v263 = vpop.f32.mrb[0].mxu0
    %264 = vmatprep.mubr.f32.mxu0 0.0
    %265 = vmatmul.mubr.f32.gmra.mrb[0].mxu0 %v121
    %v266 = vpop.f32.mrb[0].mxu0
    %v267 = vadd.f32 %v90, %v266
    %v268 = vpop.f32.mrb[0].mxu0
    %269 = vmatprep.mubr.f32.mxu0 0.0
    %270 = vmatmul.mubr.f32.gmra.mrb[0].mxu0 %v124
    %v271 = vpop.f32.mrb[0].mxu0
    %v272 = vadd.f32 %v95, %v271
    %v273 = vpop.f32.mrb[0].mxu0
    %274 = vmatprep.mubr.f32.mxu0 0.0
    %275 = vmatmul.mubr.f32.gmra.mrb[0].mxu0 %v127
    %v276 = vpop.f32.mrb[0].mxu0
    %v277 = vadd.f32 %v100, %v276
    %v278 = vpop.f32.mrb[0].mxu0
    %279 = vmatprep.mubr.f32.mxu0 0.0
    %280 = vmatmul.mubr.f32.gmra.mrb[0].mxu0 %v130
    %v281 = vpop.f32.mrb[0].mxu0
    %v282 = vadd.f32 %v105, %v281
    %v283 = vpop.f32.mrb[0].mxu0
    %284 = vdwg.mxu0
    %v285 = vmax.f32 %v247, 0.0
    %v286 = vmax.f32 %v252, 0.0
    %v287 = vmax.f32 %v257, 0.0
    %v288 = vmax.f32 %v262, 0.0
    %v289 = vmax.f32 %v267, 0.0
    %v290 = vmax.f32 %v272, 0.0
    %v291 = vmax.f32 %v277, 0.0
    %v292 = vmax.f32 %v282, 0.0
    %v293 = vld [vmem:[%s3] sm:$0xff]
    %v294 = vld [vmem:[%s3 + $0x8] sm:$0xff]
    %v295 = vld [vmem:[%s3 + $0x10] sm:$0xff]
    %v296 = vld [vmem:[%s3 + $0x18] sm:$0xff]
    %v297 = vld [vmem:[%s3 + $0x20] sm:$0xff]
    %v298 = vld [vmem:[%s3 + $0x28] sm:$0xff]
    %v299 = vld [vmem:[%s3 + $0x30] sm:$0xff]
    %v300 = vld [vmem:[%s3 + $0x38] sm:$0xff]
    %v301 = vld [vmem:[%s3 + $0x40] sm:$0xff]
    %v302 = vld [vmem:[%s3 + $0x48] sm:$0xff]
    %v303 = vld [vmem:[%s3 + $0x50] sm:$0xff]
    %v304 = vld [vmem:[%s3 + $0x58] sm:$0xff]
    %v305 = vld [vmem:[%s3 + $0x60] sm:$0xff]
    %v306 = vld [vmem:[%s3 + $0x68] sm:$0xff]
    %v307 = vld [vmem:[%s3 + $0x70] sm:$0xff]
    %v308 = vld [vmem:[%s3 + $0x78] sm:$0xff]
    %v309 = vld [vmem:[%s4] sm:$0xff]
    %v310 = vld [vmem:[%s4 + $0x8] sm:$0xff]
    %v311 = vld [vmem:[%s4 + $0x10] sm:$0xff]
    %v312 = vld [vmem:[%s4 + $0x18] sm:$0xff]
    %v313 = vld [vmem:[%s4 + $0x20] sm:$0xff]
    %v314 = vld [vmem:[%s4 + $0x28] sm:$0xff]
    %v315 = vld [vmem:[%s4 + $0x30] sm:$0xff]
    %v316 = vld [vmem:[%s4 + $0x38] sm:$0xff]
    %v317 = vld [vmem:[%s4 + $0x40] sm:$0xff]
    %v318 = vld [vmem:[%s4 + $0x48] sm:$0xff]
    %v319 = vld [vmem:[%s4 + $0x50] sm:$0xff]
    %v320 = vld [vmem:[%s4 + $0x58] sm:$0xff]
    %v321 = vld [vmem:[%s4 + $0x60] sm:$0xff]
    %v322 = vld [vmem:[%s4 + $0x68] sm:$0xff]
    %v323 = vld [vmem:[%s4 + $0x70] sm:$0xff]
    %v324 = vld [vmem:[%s4 + $0x78] sm:$0xff]
    %326 = vset.pattern.permute.xlu0 0
    %327 = vperm.xlu0 %326, %v309
    %v328 = vpop.permute.xlu0 %327
    %331 = vset.pattern.permute.xlu0 0
    %332 = vperm.xlu0 %331, %v310
    %v333 = vpop.permute.xlu0 %332
    %336 = vset.pattern.permute.xlu0 0
    %337 = vperm.xlu0 %336, %v311
    %v338 = vpop.permute.xlu0 %337
    %341 = vset.pattern.permute.xlu0 0
    %342 = vperm.xlu0 %341, %v312
    %v343 = vpop.permute.xlu0 %342
    %346 = vset.pattern.permute.xlu0 0
    %347 = vperm.xlu0 %346, %v313
    %v348 = vpop.permute.xlu0 %347
    %351 = vset.pattern.permute.xlu0 0
    %352 = vperm.xlu0 %351, %v314
    %v353 = vpop.permute.xlu0 %352
    %356 = vset.pattern.permute.xlu0 0
    %357 = vperm.xlu0 %356, %v315
    %v358 = vpop.permute.xlu0 %357
    %361 = vset.pattern.permute.xlu0 0
    %362 = vperm.xlu0 %361, %v316
    %v363 = vpop.permute.xlu0 %362
    %366 = vset.pattern.permute.xlu0 0
    %367 = vperm.xlu0 %366, %v317
    %v368 = vpop.permute.xlu0 %367
    %371 = vset.pattern.permute.xlu0 0
    %372 = vperm.xlu0 %371, %v318
    %v373 = vpop.permute.xlu0 %372
    %376 = vset.pattern.permute.xlu0 0
    %377 = vperm.xlu0 %376, %v319
    %v378 = vpop.permute.xlu0 %377
    %381 = vset.pattern.permute.xlu0 0
    %382 = vperm.xlu0 %381, %v320
    %v383 = vpop.permute.xlu0 %382
    %386 = vset.pattern.permute.xlu0 0
    %387 = vperm.xlu0 %386, %v321
    %v388 = vpop.permute.xlu0 %387
    %391 = vset.pattern.permute.xlu0 0
    %392 = vperm.xlu0 %391, %v322
    %v393 = vpop.permute.xlu0 %392
    %396 = vset.pattern.permute.xlu0 0
    %397 = vperm.xlu0 %396, %v323
    %v398 = vpop.permute.xlu0 %397
    %401 = vset.pattern.permute.xlu0 0
    %402 = vperm.xlu0 %401, %v324
    %v403 = vpop.permute.xlu0 %402
    %vm405 = vcmask 523264
    %v407 = vsel %vm405, %v293, 0
    %v410 = vsel %vm405, %v294, 0
    %v413 = vsel %vm405, %v295, 0
    %v416 = vsel %vm405, %v296, 0
    %v419 = vsel %vm405, %v297, 0
    %v422 = vsel %vm405, %v298, 0
    %v425 = vsel %vm405, %v299, 0
    %v428 = vsel %vm405, %v300, 0
    %v431 = vsel %vm405, %v301, 0
    %v434 = vsel %vm405, %v302, 0
    %v437 = vsel %vm405, %v303, 0
    %v440 = vsel %vm405, %v304, 0
    %v443 = vsel %vm405, %v305, 0
    %v446 = vsel %vm405, %v306, 0
    %v449 = vsel %vm405, %v307, 0
    %v452 = vsel %vm405, %v308, 0
    %454 = vmatprep.subr.mxu0 0.0
    %455 = vmatpush1.msra.mxu0 %v285
    %456 = vmatprep.subr.mxu0 0.0
    %457 = vmatpush1.msra.mxu0 %v286
    %458 = vmatprep.subr.mxu0 0.0
    %459 = vmatpush1.msra.mxu0 %v287
    %460 = vmatprep.subr.mxu0 0.0
    %461 = vmatpush1.msra.mxu0 %v288
    %462 = vmatprep.subr.mxu0 0.0
    %463 = vmatpush1.msra.mxu0 %v289
    %464 = vmatprep.subr.mxu0 0.0
    %465 = vmatpush1.msra.mxu0 %v290
    %466 = vmatprep.subr.mxu0 0.0
    %467 = vmatpush1.msra.mxu0 %v291
    %468 = vmatprep.subr.mxu0 0.0
    %469 = vmatpush1.msra.mxu0 %v292
    %470 = vmatprep.subr.mxu0 0.0
    %471 = vmatpush1.msra.mxu0 0.0
    %472 = vmatprep.subr.mxu0 0.0
    %473 = vmatpush1.msra.mxu0 0.0
    %474 = vmatprep.subr.mxu0 0.0
    %475 = vmatpush1.msra.mxu0 0.0
    %476 = vmatprep.subr.mxu0 0.0
    %477 = vmatpush1.msra.mxu0 0.0
    %478 = vmatprep.subr.mxu0 0.0
    %479 = vmatpush1.msra.mxu0 0.0
    %480 = vmatprep.subr.mxu0 0.0
    %481 = vmatpush1.msra.mxu0 0.0
    %482 = vmatprep.subr.mxu0 0.0
    %483 = vmatpush1.msra.mxu0 0.0
    %484 = vmatprep.subr.mxu0 0.0
    %485 = vmatpush1.msra.mxu0 0.0
    %486 = vmatprep.subr.mxu0 0.0
    %487 = vmatpush1.msra.mxu0 0.0
    %488 = vmatprep.subr.mxu0 0.0
    %489 = vmatpush1.msra.mxu0 0.0
    %490 = vmatprep.subr.mxu0 0.0
    %491 = vmatpush1.msra.mxu0 0.0
    %492 = vmatprep.subr.mxu0 0.0
    %493 = vmatpush1.msra.mxu0 0.0
    %494 = vmatprep.subr.mxu0 0.0
    %495 = vmatpush1.msra.mxu0 0.0
    %496 = vmatprep.subr.mxu0 0.0
    %497 = vmatpush1.msra.mxu0 0.0
    %498 = vmatprep.subr.mxu0 0.0
    %499 = vmatpush1.msra.mxu0 0.0
    %500 = vmatprep.subr.mxu0 0.0
    %501 = vmatpush1.msra.mxu0 0.0
    %502 = vmatprep.subr.mxu0 0.0
    %503 = vmatpush1.msra.mxu0 0.0
    %504 = vmatprep.subr.mxu0 0.0
    %505 = vmatpush1.msra.mxu0 0.0
    %506 = vmatprep.subr.mxu0 0.0
    %507 = vmatpush1.msra.mxu0 0.0
    %508 = vmatprep.subr.mxu0 0.0
    %509 = vmatpush1.msra.mxu0 0.0
    %510 = vmatprep.subr.mxu0 0.0
    %511 = vmatpush1.msra.mxu0 0.0
    %512 = vmatprep.subr.mxu0 0.0
    %513 = vmatpush1.msra.mxu0 0.0
    %514 = vmatprep.subr.mxu0 0.0
    %515 = vmatpush1.msra.mxu0 0.0
    %516 = vmatprep.subr.mxu0 0.0
    %517 = vmatpush1.msra.mxu0 0.0
    %518 = vmatprep.mubr.f32.mxu0 0.0
    %519 = vmatmul.mubr.f32.gmra.mrb[0].mxu0 %v407
    %v520 = vpop.f32.mrb[0].mxu0
    %v521 = vadd.f32 %v328, %v520
    %v522 = vpop.f32.mrb[0].mxu0
    %523 = vmatprep.mubr.f32.mxu0 0.0
    %524 = vmatmul.mubr.f32.gmra.mrb[0].mxu0 %v410
    %v525 = vpop.f32.mrb[0].mxu0
    %v526 = vadd.f32 %v333, %v525
    %v527 = vpop.f32.mrb[0].mxu0
    %528 = vmatprep.mubr.f32.mxu0 0.0
    %529 = vmatmul.mubr.f32.gmra.mrb[0].mxu0 %v413
    %v530 = vpop.f32.mrb[0].mxu0
    %v531 = vadd.f32 %v338, %v530
    %v532 = vpop.f32.mrb[0].mxu0
    %533 = vmatprep.mubr.f32.mxu0 0.0
    %534 = vmatmul.mubr.f32.gmra.mrb[0].mxu0 %v416
    %v535 = vpop.f32.mrb[0].mxu0
    %v536 = vadd.f32 %v343, %v535
    %v537 = vpop.f32.mrb[0].mxu0
    %538 = vmatprep.mubr.f32.mxu0 0.0
    %539 = vmatmul.mubr.f32.gmra.mrb[0].mxu0 %v419
    %v540 = vpop.f32.mrb[0].mxu0
    %v541 = vadd.f32 %v348, %v540
    %v542 = vpop.f32.mrb[0].mxu0
    %543 = vmatprep.mubr.f32.mxu0 0.0
    %544 = vmatmul.mubr.f32.gmra.mrb[0].mxu0 %v422
    %v545 = vpop.f32.mrb[0].mxu0
    %v546 = vadd.f32 %v353, %v545
    %v547 = vpop.f32.mrb[0].mxu0
    %548 = vmatprep.mubr.f32.mxu0 0.0
    %549 = vmatmul.mubr.f32.gmra.mrb[0].mxu0 %v425
    %v550 = vpop.f32.mrb[0].mxu0
    %v551 = vadd.f32 %v358, %v550
    %v552 = vpop.f32.mrb[0].mxu0
    %553 = vmatprep.mubr.f32.mxu0 0.0
    %554 = vmatmul.mubr.f32.gmra.mrb[0].mxu0 %v428
    %v555 = vpop.f32.mrb[0].mxu0
    %v556 = vadd.f32 %v363, %v555
    %v557 = vpop.f32.mrb[0].mxu0
    %558 = vmatprep.mubr.f32.mxu0 0.0
    %559 = vmatmul.mubr.f32.gmra.mrb[0].mxu0 %v431
    %v560 = vpop.f32.mrb[0].mxu0
    %v561 = vadd.f32 %v368, %v560
    %v562 = vpop.f32.mrb[0].mxu0
    %563 = vmatprep.mubr.f32.mxu0 0.0
    %564 = vmatmul.mubr.f32.gmra.mrb[0].mxu0 %v434
    %v565 = vpop.f32.mrb[0].mxu0
    %v566 = vadd.f32 %v373, %v565
    %v567 = vpop.f32.mrb[0].mxu0
    %568 = vmatprep.mubr.f32.mxu0 0.0
    %569 = vmatmul.mubr.f32.gmra.mrb[0].mxu0 %v437
    %v570 = vpop.f32.mrb[0].mxu0
    %v571 = vadd.f32 %v378, %v570
    %v572 = vpop.f32.mrb[0].mxu0
    %573 = vmatprep.mubr.f32.mxu0 0.0
    %574 = vmatmul.mubr.f32.gmra.mrb[0].mxu0 %v440
    %v575 = vpop.f32.mrb[0].mxu0
    %v576 = vadd.f32 %v383, %v575
    %v577 = vpop.f32.mrb[0].mxu0
    %578 = vmatprep.mubr.f32.mxu0 0.0
    %579 = vmatmul.mubr.f32.gmra.mrb[0].mxu0 %v443
    %v580 = vpop.f32.mrb[0].mxu0
    %v581 = vadd.f32 %v388, %v580
    %v582 = vpop.f32.mrb[0].mxu0
    %583 = vmatprep.mubr.f32.mxu0 0.0
    %584 = vmatmul.mubr.f32.gmra.mrb[0].mxu0 %v446
    %v585 = vpop.f32.mrb[0].mxu0
    %v586 = vadd.f32 %v393, %v585
    %v587 = vpop.f32.mrb[0].mxu0
    %588 = vmatprep.mubr.f32.mxu0 0.0
    %589 = vmatmul.mubr.f32.gmra.mrb[0].mxu0 %v449
    %v590 = vpop.f32.mrb[0].mxu0
    %v591 = vadd.f32 %v398, %v590
    %v592 = vpop.f32.mrb[0].mxu0
    %593 = vmatprep.mubr.f32.mxu0 0.0
    %594 = vmatmul.mubr.f32.gmra.mrb[0].mxu0 %v452
    %v595 = vpop.f32.mrb[0].mxu0
    %v596 = vadd.f32 %v403, %v595
    %v597 = vpop.f32.mrb[0].mxu0
    %598 = vdwg.mxu0
    %v599 = vmax.f32 %v521, 0.0
    %v600 = vmax.f32 %v526, 0.0
    %v601 = vmax.f32 %v531, 0.0
    %v602 = vmax.f32 %v536, 0.0
    %v603 = vmax.f32 %v541, 0.0
    %v604 = vmax.f32 %v546, 0.0
    %v605 = vmax.f32 %v551, 0.0
    %v606 = vmax.f32 %v556, 0.0
    %v607 = vmax.f32 %v561, 0.0
    %v608 = vmax.f32 %v566, 0.0
    %v609 = vmax.f32 %v571, 0.0
    %v610 = vmax.f32 %v576, 0.0
    %v611 = vmax.f32 %v581, 0.0
    %v612 = vmax.f32 %v586, 0.0
    %v613 = vmax.f32 %v591, 0.0
    %v614 = vmax.f32 %v596, 0.0
    %v615 = vld [vmem:[%s5] sm:$0xff]
    %v616 = vld [vmem:[%s5 + $0x8] sm:$0xff]
    %v617 = vld [vmem:[%s5 + $0x10] sm:$0xff]
    %v618 = vld [vmem:[%s5 + $0x18] sm:$0xff]
    %v619 = vld [vmem:[%s5 + $0x20] sm:$0xff]
    %v620 = vld [vmem:[%s5 + $0x28] sm:$0xff]
    %v621 = vld [vmem:[%s5 + $0x30] sm:$0xff]
    %v622 = vld [vmem:[%s5 + $0x38] sm:$0xff]
    %v623 = vld [vmem:[%s6] sm:$0xff]
    %v624 = vld [vmem:[%s6 + $0x8] sm:$0xff]
    %v625 = vld [vmem:[%s6 + $0x10] sm:$0xff]
    %v626 = vld [vmem:[%s6 + $0x18] sm:$0xff]
    %v627 = vld [vmem:[%s6 + $0x20] sm:$0xff]
    %v628 = vld [vmem:[%s6 + $0x28] sm:$0xff]
    %v629 = vld [vmem:[%s6 + $0x30] sm:$0xff]
    %v630 = vld [vmem:[%s6 + $0x38] sm:$0xff]
    %632 = vset.pattern.permute.xlu0 0
    %633 = vperm.xlu0 %632, %v623
    %v634 = vpop.permute.xlu0 %633
    %637 = vset.pattern.permute.xlu0 0
    %638 = vperm.xlu0 %637, %v624
    %v639 = vpop.permute.xlu0 %638
    %642 = vset.pattern.permute.xlu0 0
    %643 = vperm.xlu0 %642, %v625
    %v644 = vpop.permute.xlu0 %643
    %647 = vset.pattern.permute.xlu0 0
    %648 = vperm.xlu0 %647, %v626
    %v649 = vpop.permute.xlu0 %648
    %652 = vset.pattern.permute.xlu0 0
    %653 = vperm.xlu0 %652, %v627
    %v654 = vpop.permute.xlu0 %653
    %657 = vset.pattern.permute.xlu0 0
    %658 = vperm.xlu0 %657, %v628
    %v659 = vpop.permute.xlu0 %658
    %662 = vset.pattern.permute.xlu0 0
    %663 = vperm.xlu0 %662, %v629
    %v664 = vpop.permute.xlu0 %663
    %667 = vset.pattern.permute.xlu0 0
    %668 = vperm.xlu0 %667, %v630
    %v669 = vpop.permute.xlu0 %668
    %671 = vmatprep.subr.mxu0 0.0
    %672 = vmatpush1.msra.mxu0 %v599
    %673 = vmatprep.subr.mxu0 0.0
    %674 = vmatpush1.msra.mxu0 %v600
    %675 = vmatprep.subr.mxu0 0.0
    %676 = vmatpush1.msra.mxu0 %v601
    %677 = vmatprep.subr.mxu0 0.0
    %678 = vmatpush1.msra.mxu0 %v602
    %679 = vmatprep.subr.mxu0 0.0
    %680 = vmatpush1.msra.mxu0 %v603
    %681 = vmatprep.subr.mxu0 0.0
    %682 = vmatpush1.msra.mxu0 %v604
    %683 = vmatprep.subr.mxu0 0.0
    %684 = vmatpush1.msra.mxu0 %v605
    %685 = vmatprep.subr.mxu0 0.0
    %686 = vmatpush1.msra.mxu0 %v606
    %687 = vmatprep.subr.mxu0 0.0
    %688 = vmatpush1.msra.mxu0 %v607
    %689 = vmatprep.subr.mxu0 0.0
    %690 = vmatpush1.msra.mxu0 %v608
    %691 = vmatprep.subr.mxu0 0.0
    %692 = vmatpush1.msra.mxu0 %v609
    %693 = vmatprep.subr.mxu0 0.0
    %694 = vmatpush1.msra.mxu0 %v610
    %695 = vmatprep.subr.mxu0 0.0
    %696 = vmatpush1.msra.mxu0 %v611
    %697 = vmatprep.subr.mxu0 0.0
    %698 = vmatpush1.msra.mxu0 %v612
    %699 = vmatprep.subr.mxu0 0.0
    %700 = vmatpush1.msra.mxu0 %v613
    %701 = vmatprep.subr.mxu0 0.0
    %702 = vmatpush1.msra.mxu0 %v614
    %703 = vmatprep.subr.mxu0 0.0
    %704 = vmatpush1.msra.mxu0 0.0
    %705 = vmatprep.subr.mxu0 0.0
    %706 = vmatpush1.msra.mxu0 0.0
    %707 = vmatprep.subr.mxu0 0.0
    %708 = vmatpush1.msra.mxu0 0.0
    %709 = vmatprep.subr.mxu0 0.0
    %710 = vmatpush1.msra.mxu0 0.0
    %711 = vmatprep.subr.mxu0 0.0
    %712 = vmatpush1.msra.mxu0 0.0
    %713 = vmatprep.subr.mxu0 0.0
    %714 = vmatpush1.msra.mxu0 0.0
    %715 = vmatprep.subr.mxu0 0.0
    %716 = vmatpush1.msra.mxu0 0.0
    %717 = vmatprep.subr.mxu0 0.0
    %718 = vmatpush1.msra.mxu0 0.0
    %719 = vmatprep.subr.mxu0 0.0
    %720 = vmatpush1.msra.mxu0 0.0
    %721 = vmatprep.subr.mxu0 0.0
    %722 = vmatpush1.msra.mxu0 0.0
    %723 = vmatprep.subr.mxu0 0.0
    %724 = vmatpush1.msra.mxu0 0.0
    %725 = vmatprep.subr.mxu0 0.0
    %726 = vmatpush1.msra.mxu0 0.0
    %727 = vmatprep.subr.mxu0 0.0
    %728 = vmatpush1.msra.mxu0 0.0
    %729 = vmatprep.subr.mxu0 0.0
    %730 = vmatpush1.msra.mxu0 0.0
    %731 = vmatprep.subr.mxu0 0.0
    %732 = vmatpush1.msra.mxu0 0.0
    %733 = vmatprep.subr.mxu0 0.0
    %734 = vmatpush1.msra.mxu0 0.0
    %735 = vmatprep.mubr.f32.mxu0 0.0
    %736 = vmatmul.mubr.f32.gmra.mrb[0].mxu0 %v615
    %v737 = vpop.f32.mrb[0].mxu0
    %v738 = vadd.f32 %v634, %v737
    %v739 = vpop.f32.mrb[0].mxu0
    %740 = vmatprep.mubr.f32.mxu0 0.0
    %741 = vmatmul.mubr.f32.gmra.mrb[0].mxu0 %v616
    %v742 = vpop.f32.mrb[0].mxu0
    %v743 = vadd.f32 %v639, %v742
    %v744 = vpop.f32.mrb[0].mxu0
    %745 = vmatprep.mubr.f32.mxu0 0.0
    %746 = vmatmul.mubr.f32.gmra.mrb[0].mxu0 %v617
    %v747 = vpop.f32.mrb[0].mxu0
    %v748 = vadd.f32 %v644, %v747
    %v749 = vpop.f32.mrb[0].mxu0
    %750 = vmatprep.mubr.f32.mxu0 0.0
    %751 = vmatmul.mubr.f32.gmra.mrb[0].mxu0 %v618
    %v752 = vpop.f32.mrb[0].mxu0
    %v753 = vadd.f32 %v649, %v752
    %v754 = vpop.f32.mrb[0].mxu0
    %755 = vmatprep.mubr.f32.mxu0 0.0
    %756 = vmatmul.mubr.f32.gmra.mrb[0].mxu0 %v619
    %v757 = vpop.f32.mrb[0].mxu0
    %v758 = vadd.f32 %v654, %v757
    %v759 = vpop.f32.mrb[0].mxu0
    %760 = vmatprep.mubr.f32.mxu0 0.0
    %761 = vmatmul.mubr.f32.gmra.mrb[0].mxu0 %v620
    %v762 = vpop.f32.mrb[0].mxu0
    %v763 = vadd.f32 %v659, %v762
    %v764 = vpop.f32.mrb[0].mxu0
    %765 = vmatprep.mubr.f32.mxu0 0.0
    %766 = vmatmul.mubr.f32.gmra.mrb[0].mxu0 %v621
    %v767 = vpop.f32.mrb[0].mxu0
    %v768 = vadd.f32 %v664, %v767
    %v769 = vpop.f32.mrb[0].mxu0
    %770 = vmatprep.mubr.f32.mxu0 0.0
    %771 = vmatmul.mubr.f32.gmra.mrb[0].mxu0 %v622
    %v772 = vpop.f32.mrb[0].mxu0
    %v773 = vadd.f32 %v669, %v772
    %v774 = vpop.f32.mrb[0].mxu0
    %775 = vdwg.mxu0
    %v776 = vmax.f32 %v738, 0.0
    %v777 = vmax.f32 %v743, 0.0
    %v778 = vmax.f32 %v748, 0.0
    %v779 = vmax.f32 %v753, 0.0
    %v780 = vmax.f32 %v758, 0.0
    %v781 = vmax.f32 %v763, 0.0
    %v782 = vmax.f32 %v768, 0.0
    %v783 = vmax.f32 %v773, 0.0
    %v784 = vld [vmem:[%s7] sm:$0x1]
    %v785 = vld [vmem:[#allocation2] sm:$0x1]
    %787 = vset.pattern.permute.xlu0 0
    %788 = vperm.xlu0 %787, %v785
    %v789 = vpop.permute.xlu0 %788
    %v791 = vlaneseq
    %v792 = vshrl.u32 %v791, 7
    %v793 = vsub.s32 0, %v792
    %v794 = vrot.slane %v789, %v793
    %v796 = vsel %vm405, %v784, 0
    %798 = vmatprep.subr.mxu0 0.0
    %799 = vmatpush1.msra.mxu0 %v776
    %800 = vmatprep.subr.mxu0 0.0
    %801 = vmatpush1.msra.mxu0 %v777
    %802 = vmatprep.subr.mxu0 0.0
    %803 = vmatpush1.msra.mxu0 %v778
    %804 = vmatprep.subr.mxu0 0.0
    %805 = vmatpush1.msra.mxu0 %v779
    %806 = vmatprep.subr.mxu0 0.0
    %807 = vmatpush1.msra.mxu0 %v780
    %808 = vmatprep.subr.mxu0 0.0
    %809 = vmatpush1.msra.mxu0 %v781
    %810 = vmatprep.subr.mxu0 0.0
    %811 = vmatpush1.msra.mxu0 %v782
    %812 = vmatprep.subr.mxu0 0.0
    %813 = vmatpush1.msra.mxu0 %v783
    %814 = vmatprep.subr.mxu0 0.0
    %815 = vmatpush1.msra.mxu0 0.0
    %816 = vmatprep.subr.mxu0 0.0
    %817 = vmatpush1.msra.mxu0 0.0
    %818 = vmatprep.subr.mxu0 0.0
    %819 = vmatpush1.msra.mxu0 0.0
    %820 = vmatprep.subr.mxu0 0.0
    %821 = vmatpush1.msra.mxu0 0.0
    %822 = vmatprep.subr.mxu0 0.0
    %823 = vmatpush1.msra.mxu0 0.0
    %824 = vmatprep.subr.mxu0 0.0
    %825 = vmatpush1.msra.mxu0 0.0
    %826 = vmatprep.subr.mxu0 0.0
    %827 = vmatpush1.msra.mxu0 0.0
    %828 = vmatprep.subr.mxu0 0.0
    %829 = vmatpush1.msra.mxu0 0.0
    %830 = vmatprep.subr.mxu0 0.0
    %831 = vmatpush1.msra.mxu0 0.0
    %832 = vmatprep.subr.mxu0 0.0
    %833 = vmatpush1.msra.mxu0 0.0
    %834 = vmatprep.subr.mxu0 0.0
    %835 = vmatpush1.msra.mxu0 0.0
    %836 = vmatprep.subr.mxu0 0.0
    %837 = vmatpush1.msra.mxu0 0.0
    %838 = vmatprep.subr.mxu0 0.0
    %839 = vmatpush1.msra.mxu0 0.0
    %840 = vmatprep.subr.mxu0 0.0
    %841 = vmatpush1.msra.mxu0 0.0
    %842 = vmatprep.subr.mxu0 0.0
    %843 = vmatpush1.msra.mxu0 0.0
    %844 = vmatprep.subr.mxu0 0.0
    %845 = vmatpush1.msra.mxu0 0.0
    %846 = vmatprep.subr.mxu0 0.0
    %847 = vmatpush1.msra.mxu0 0.0
    %848 = vmatprep.subr.mxu0 0.0
    %849 = vmatpush1.msra.mxu0 0.0
    %850 = vmatprep.subr.mxu0 0.0
    %851 = vmatpush1.msra.mxu0 0.0
    %852 = vmatprep.subr.mxu0 0.0
    %853 = vmatpush1.msra.mxu0 0.0
    %854 = vmatprep.subr.mxu0 0.0
    %855 = vmatpush1.msra.mxu0 0.0
    %856 = vmatprep.subr.mxu0 0.0
    %857 = vmatpush1.msra.mxu0 0.0
    %858 = vmatprep.subr.mxu0 0.0
    %859 = vmatpush1.msra.mxu0 0.0
    %860 = vmatprep.subr.mxu0 0.0
    %861 = vmatpush1.msra.mxu0 0.0
    %862 = vmatprep.mubr.f32.mxu0 0.0
    %863 = vmatmul.mubr.f32.gmra.mrb[0].mxu0 %v796
    %v864 = vpop.f32.mrb[0].mxu0
    %v865 = vadd.f32 %v794, %v864
    %v866 = vpop.f32.mrb[0].mxu0
    %867 = vdwg.mxu0
    %v868 = vxor.u32 %v865, 2147483648
    %v869 = vmul.f32 %v868, 1.442695
    %v870 = vpow.pop %v869
    %v871 = vadd.f32 %v870, 1.0
    %v872 = vrcp.pop %v871
    %v873 = vmul.f32 1.0, %v872
    %874 = vst [vmem:[#allocation3] sm:$0x1] %v873
    // Predicated region
    $region38: #{cvd_forward.1} parent=1 // pred_check
      _
    $region39: #{cvd_forward.1} parent=1 // pred_check_branch
      %876 = sbr.rel (0) target = $region41
    $region40: #{cvd_forward.1} parent=1 // pred_region
      %s878 = ssub.s32 16, 16
      %879 = vsyncadd [#allocation4], %s878
      %s881 = sshll.u32 [#allocation3], 4
      %s882 = int_to_ptr.vmem [resolvable:$true] %s881
      %884 = dma.vmem_to_hbm [thread:$0]  %s882, 16, %s9, [#allocation4]
    $region41: #{cvd_forward.1} parent=1 // pred_fallthru
      _
    // Predicated region
    $region42: #{cvd_forward.1} parent=1 // pred_check
      _
    $region43: #{cvd_forward.1} parent=1 // pred_check_branch
      %886 = sbr.rel (0) target = $region45
    $region44: #{cvd_forward.1} parent=1 // pred_region
      %887 = dma.done [#allocation4], 16
    $region45: #{cvd_forward.1} parent=1 // pred_fallthru
      _
    %888 = vsyncpa [#allocation4], 1

</llo_original>
